<compile_context>
chip_gen: v7x
topology: tpu7x:2x2x1
jax: 0.10.0
libtpu: 0.0.40
codegen_flags: <defaults>
</compile_context>

<pallas_src>
import jax
import jax.numpy as jnp
from jax import lax
from jax.experimental import pallas as pl
from jax.experimental.pallas import tpu as pltpu

RATIO = 0.5  # TopKPooling default ratio


def _round_up(a, m):
    return ((a + m - 1) // m) * m


# --------------------------------------------------------------------------- #
# Kernel A: node_predictions = x @ W^T + b ; score = tanh(h . p_hat)
# Tiled over node rows (tm_a up to 512), fully parallel.
# --------------------------------------------------------------------------- #
def _linear_score_kernel(x_ref, wt_ref, b_ref, p_ref, npred_ref, score_ref):
    h = jnp.dot(x_ref[...], wt_ref[...],
                preferred_element_type=jnp.float32) + b_ref[...]      # [TMa, CP]
    npred_ref[...] = h.astype(npred_ref.dtype)
    # p_ref is pre-normalized and zero-padded beyond C, so padded lanes add 0.
    score_ref[...] = jnp.tanh(jnp.sum(h * p_ref[...], axis=1, keepdims=True))


# --------------------------------------------------------------------------- #
# Kernel B: per-graph top-k (ratio) selection + gated global mean pool.
# Grid = (split S [parallel], row tiles, column chunks).
#   rank    : accumulated per row tile over column chunks in rank_ref [TM,1]
#   acc     : per-graph pooled sums accumulated in acc_ref [B,CP]
#   finalize: exact per-graph divide by k, one partial [B,CP] output per split.
# --------------------------------------------------------------------------- #
def _topk_pool_kernel(x_ref, wt_ref, b_ref, sc_ref, bc_ref, kn_ref,
                      sr_ref, br_ref, kg_ref, out_ref, acc_ref, rank_ref):
    s = pl.program_id(0)
    i = pl.program_id(1)
    j = pl.program_id(2)
    nI = pl.num_programs(1)
    nJ = pl.num_programs(2)
    TM = sc_ref.shape[0]
    TN = sr_ref.shape[1]
    B = kg_ref.shape[0]

    @pl.when((i == 0) & (j == 0))
    def _():
        acc_ref[...] = jnp.zeros_like(acc_ref)

    @pl.when(j == 0)
    def _():
        rank_ref[...] = jnp.zeros_like(rank_ref)

    score_col = sc_ref[...]                                            # [TM, 1]
    score_row = sr_ref[...]                                            # [1, TN]
    batch_col = bc_ref[...]                                            # [TM, 1] i32
    batch_row = br_ref[...]                                            # [1, TN] i32

    # Global node indices for the tie-break, built from tiny broadcast iotas.
    row_idx = (s * nI + i) * TM + lax.broadcasted_iota(jnp.int32, (TM, 1), 0)
    col_idx = j * TN + lax.broadcasted_iota(jnp.int32, (1, TN), 1)

    # node m outranks node n if score_m > score_n (ties broken by lower index),
    # counted only within the same graph.
    same = batch_col == batch_row                                      # [TM, TN]
    greater = (score_row > score_col) | (
        (score_row == score_col) & (col_idx < row_idx))                # [TM, TN]
    rank_ref[...] += jnp.sum((greater & same).astype(jnp.float32),
                             axis=1, keepdims=True)                    # [TM, 1]

    @pl.when(j == nJ - 1)
    def _():
        selected = rank_ref[...] < kn_ref[...]                         # [TM, 1]
        gate = jnp.where(selected, score_col, 0.0)                     # [TM, 1]
        # Recompute h from the [TM, D] x tile (cheaper than re-reading the
        # CP=128-padded node_predictions slab from HBM).
        h = jnp.dot(x_ref[...], wt_ref[...],
                    preferred_element_type=jnp.float32) + b_ref[...]   # [TM, CP]
        contrib = h * gate                                             # [TM, CP]
        graph_iota = lax.broadcasted_iota(jnp.int32, (1, B), 1)        # [1, B]
        oh_tile = (batch_col == graph_iota).astype(jnp.float32)        # [TM, B]
        # acc[b, c] += sum_n oh_tile[n, b] * contrib[n, c]
        acc_ref[...] += lax.dot_general(
            oh_tile, contrib, (((0,), (0,)), ((), ())),
            preferred_element_type=jnp.float32)                        # [B, CP]

    @pl.when((i == nI - 1) & (j == nJ - 1))
    def _():
        # Exact per-graph mean divide, once per split at finalize.
        out_ref[...] = (acc_ref[...] / kg_ref[...]).astype(out_ref.dtype)


# --------------------------------------------------------------------------- #
# Wrapper
# --------------------------------------------------------------------------- #
def linear_graph_classifier(x, batch, W, b, p, num_graphs):
    """Forward pass. Returns (x_final [B, C], node_predictions [N, C])."""
    # TODO(synk): TopKPooling's edge_index/edge_attr filtering (filter_adj) is not
    # implemented; its outputs are discarded by the PyTorch module's forward.
    N, D = x.shape
    C = W.shape[0]
    B = int(num_graphs)
    f32 = jnp.float32

    # Tile selection: big kernel-A tiles (HBM/overhead bound), 128-row tiles and
    # lane-dense 512/2048-wide column chunks for kernel B (bounded VMEM temps).
    if N > 512:
        tm_a, tm_b = 512, 128
        tn = 2048 if N >= 2048 else 512
        Np = _round_up(N, max(tm_a, tn))
    else:
        Np = _round_up(max(N, 8), 8)
        tm_a = tm_b = tn = Np
    CP = _round_up(max(C, 128), 128)          # lane-dense padded class dim

    n_row_tiles = Np // tm_b
    S = 2 if (n_row_tiles > 1 and n_row_tiles % 2 == 0) else 1   # v7x megacore split
    nI = n_row_tiles // S
    nJ = Np // tn

    # Pad inputs. Padded nodes get dummy graph id B -> never selected / pooled.
    x_p = jnp.zeros((Np, D), f32).at[:N, :].set(x.astype(f32))
    batch_i = batch.astype(jnp.int32)
    batch_col = jnp.full((Np, 1), B, jnp.int32).at[:N, 0].set(batch_i)
    batch_row = batch_col.reshape(1, Np)

    wt = jnp.zeros((D, CP), f32).at[:, :C].set(W.T.astype(f32))
    b2 = jnp.zeros((1, CP), f32).at[0, :C].set(b.astype(f32))
    p_flat = p.reshape(-1).astype(f32)
    p_hat = p_flat / jnp.linalg.norm(p_flat)
    p2 = jnp.zeros((1, CP), f32).at[0, :C].set(p_hat)

    # Per-graph counts / k hoisted out of the grid loop (cheap host-side prep).
    counts = jnp.sum((batch_i[:, None] ==
                      jnp.arange(B, dtype=jnp.int32)[None, :]).astype(f32), axis=0)
    k = jnp.ceil(RATIO * counts)                                    # [B]
    k_graph = jnp.maximum(k, 1.0).reshape(B, 1)                     # divide-safe
    k_node = jnp.zeros((Np, 1), f32).at[:N, 0].set(k[batch_i])      # padded rows: 0

    # ---- kernel A: Linear + attention score (parallel over big node tiles) ----
    npred_slab, score_col = pl.pallas_call(
        _linear_score_kernel,
        out_shape=(jax.ShapeDtypeStruct((Np, CP), f32),
                   jax.ShapeDtypeStruct((Np, 1), f32)),
        grid=(Np // tm_a,),
        in_specs=[
            pl.BlockSpec((tm_a, D), lambda i: (i, 0)),
            pl.BlockSpec((D, CP), lambda i: (0, 0)),
            pl.BlockSpec((1, CP), lambda i: (0, 0)),
            pl.BlockSpec((1, CP), lambda i: (0, 0)),
        ],
        out_specs=(
            pl.BlockSpec((tm_a, CP), lambda i: (i, 0)),
            pl.BlockSpec((tm_a, 1), lambda i: (i, 0)),
        ),
        compiler_params=pltpu.CompilerParams(
            dimension_semantics=("parallel",)),
    )(x_p, wt, b2, p2)

    # Row layout of the same score values (N*4-byte relayout; keeps comparison
    # operands on one numeric path so tie-breaks stay consistent).
    score_row = score_col.reshape(1, Np)

    # ---- kernel B: per-graph top-k + gated mean pool ----
    partials = pl.pallas_call(
        _topk_pool_kernel,
        out_shape=jax.ShapeDtypeStruct((S, B, CP), f32),
        grid=(S, nI, nJ),
        in_specs=[
            pl.BlockSpec((tm_b, D), lambda s, i, j: (s * nI + i, 0)),   # x tile
            pl.BlockSpec((D, CP), lambda s, i, j: (0, 0)),              # W^T
            pl.BlockSpec((1, CP), lambda s, i, j: (0, 0)),              # bias
            pl.BlockSpec((tm_b, 1), lambda s, i, j: (s * nI + i, 0)),   # score col
            pl.BlockSpec((tm_b, 1), lambda s, i, j: (s * nI + i, 0)),   # batch col
            pl.BlockSpec((tm_b, 1), lambda s, i, j: (s * nI + i, 0)),   # k per node
            pl.BlockSpec((1, tn), lambda s, i, j: (0, j)),              # score row chunk
            pl.BlockSpec((1, tn), lambda s, i, j: (0, j)),              # batch row chunk
            pl.BlockSpec((B, 1), lambda s, i, j: (0, 0)),               # k per graph
        ],
        out_specs=pl.BlockSpec((None, B, CP), lambda s, i, j: (s, 0, 0)),
        scratch_shapes=[pltpu.VMEM((B, CP), f32),        # pooled accumulator
                        pltpu.VMEM((tm_b, 1), f32)],     # partial rank
        compiler_params=pltpu.CompilerParams(
            dimension_semantics=("parallel", "arbitrary", "arbitrary")),
    )(x_p, wt, b2, score_col, batch_col, k_node, score_row, batch_row, k_graph)

    x_final = jnp.sum(partials, axis=0)[:, :C]
    node_predictions = npred_slab[:N, :C]
    return x_final, node_predictions


# --------------------------------------------------------------------------- #
# Pure-JAX reference mirroring the PyTorch forward semantics.
# --------------------------------------------------------------------------- #
def reference(x, batch, W, b, p, num_graphs, ratio=RATIO):
    npred = x @ W.T + b
    score = jnp.tanh((npred @ p.reshape(-1)) / jnp.linalg.norm(p))
    N = x.shape[0]
    idx = jnp.arange(N)
    same = batch[:, None] == batch[None, :]
    greater = (score[None, :] > score[:, None]) | (
        (score[None, :] == score[:, None]) & (idx[None, :] < idx[:, None]))
    rank = jnp.sum(same & greater, axis=1)
    counts = jnp.sum(batch[:, None] == jnp.arange(num_graphs)[None, :], axis=0)
    k = jnp.ceil(ratio * counts).astype(jnp.int32)
    selected = rank < k[batch]
    pooled = npred * jnp.where(selected, score, 0.0)[:, None]
    onehot = (batch[:, None] ==
              jnp.arange(num_graphs)[None, :]).astype(x.dtype)
    x_final = (onehot.T @ pooled) / k.astype(x.dtype)[:, None]
    return x_final, npred


if __name__ == "__main__":
    key = jax.random.PRNGKey(0)
    kx, kw, kb, kp = jax.random.split(key, 4)

    input_dim, num_classes = 32, 8
    num_graphs = 2
    nodes_per_graph = 8
    N = num_graphs * nodes_per_graph

    # data.x / data.batch
    x = jax.random.normal(kx, (N, input_dim), dtype=jnp.float32)
    batch = jnp.repeat(jnp.arange(num_graphs, dtype=jnp.int32), nodes_per_graph)

    # nn.Linear(input_dim, num_classes) parameters (deterministic synthetic init)
    lim = 1.0 / (input_dim ** 0.5)
    W = jax.random.uniform(kw, (num_classes, input_dim), jnp.float32, -lim, lim)
    b = jax.random.uniform(kb, (num_classes,), jnp.float32, -lim, lim)
    # TopKPooling(num_classes) attention weight, shape [1, num_classes]
    p = jax.random.uniform(kp, (1, num_classes), jnp.float32, -1.0, 1.0)

    x_final, node_preds = linear_graph_classifier(x, batch, W, b, p, num_graphs)
    jax.block_until_ready((x_final, node_preds))

    ref_final, ref_preds = reference(x, batch, W, b, p, num_graphs)
    assert jnp.allclose(node_preds, ref_preds, atol=1e-3, rtol=1e-3)
    assert jnp.allclose(x_final, ref_final, atol=1e-3, rtol=1e-3)
    print("KERNEL_OK")
</pallas_src>

<mosaic_0001>
module attributes {stable_mosaic.version = 11 : i64} {
  func.func @_linear_score_kernel(%arg0: i32, %arg1: memref<16x32xf32, #tpu.memory_space<vmem>>, %arg2: memref<32x128xf32, #tpu.memory_space<vmem>>, %arg3: memref<1x128xf32, #tpu.memory_space<vmem>>, %arg4: memref<1x128xf32, #tpu.memory_space<vmem>>, %arg5: memref<16x128xf32, #tpu.memory_space<vmem>>, %arg6: memref<16x1xf32, #tpu.memory_space<vmem>>) attributes {dimension_semantics = [#tpu.dimension_semantics<parallel>], iteration_bounds = array<i64: 1>, scalar_prefetch = 0 : i64, scratch_operands = 0 : i64, tpu.core_type = #tpu.core_type<tc>, window_params = [{transform_indices = @transform_0, window_bounds = array<i64: 16, 32>}, {pipeline_mode = #tpu.pipeline_mode<synchronous>, transform_indices = @transform_1, window_bounds = array<i64: 32, 128>}, {pipeline_mode = #tpu.pipeline_mode<synchronous>, transform_indices = @transform_2, window_bounds = array<i64: 1, 128>}, {pipeline_mode = #tpu.pipeline_mode<synchronous>, transform_indices = @transform_3, window_bounds = array<i64: 1, 128>}, {transform_indices = @transform_4, window_bounds = array<i64: 16, 128>}, {transform_indices = @transform_5, window_bounds = array<i64: 16, 1>}]} {
    %c0 = arith.constant 0 : index
    %c0_0 = arith.constant 0 : index
    %0 = vector.load %arg1[%c0, %c0_0] : memref<16x32xf32, #tpu.memory_space<vmem>>, vector<16x32xf32>
    %c0_1 = arith.constant 0 : index
    %c0_2 = arith.constant 0 : index
    %1 = vector.load %arg2[%c0_1, %c0_2] : memref<32x128xf32, #tpu.memory_space<vmem>>, vector<32x128xf32>
    %cst = arith.constant dense<0.000000e+00> : vector<16x128xf32>
    %2 = tpu.matmul %0, %1, %cst {dimension_numbers = #tpu.dot_dimension_numbers<[1], [0], [0], [1], [0, 0, 1, 1], [], []>} : vector<16x32xf32>, vector<32x128xf32>, vector<16x128xf32> -> vector<16x128xf32>
    %c0_3 = arith.constant 0 : index
    %c0_4 = arith.constant 0 : index
    %3 = vector.load %arg3[%c0_3, %c0_4] : memref<1x128xf32, #tpu.memory_space<vmem>>, vector<1x128xf32>
    %4 = vector.broadcast %3 : vector<1x128xf32> to vector<16x128xf32>
    %5 = arith.addf %2, %4 : vector<16x128xf32>
    %c0_5 = arith.constant 0 : index
    %c0_6 = arith.constant 0 : index
    %6 = vector.load %arg5[%c0_5, %c0_6] : memref<16x128xf32, #tpu.memory_space<vmem>>, vector<16x128xf32>
    tpu.vector_store %arg5[%c0_5, %c0_6], %5 {strides = array<i32>} : memref<16x128xf32, #tpu.memory_space<vmem>>, vector<16x128xf32>,
    %c0_7 = arith.constant 0 : index
    %c0_8 = arith.constant 0 : index
    %7 = vector.load %arg4[%c0_7, %c0_8] : memref<1x128xf32, #tpu.memory_space<vmem>>, vector<1x128xf32>
    %8 = vector.broadcast %7 : vector<1x128xf32> to vector<16x128xf32>
    %9 = arith.mulf %5, %8 : vector<16x128xf32>
    %cst_9 = arith.constant dense<0.000000e+00> : vector<16xf32>
    %10 = vector.multi_reduction <add>, %9, %cst_9 [1] : vector<16x128xf32> to vector<16xf32>
    %11 = vector.shape_cast %10 : vector<16xf32> to vector<16x1xf32>
    %12 = math.tanh %11 : vector<16x1xf32>
    %c0_10 = arith.constant 0 : index
    %c0_11 = arith.constant 0 : index
    %13 = vector.load %arg6[%c0_10, %c0_11] : memref<16x1xf32, #tpu.memory_space<vmem>>, vector<16x1xf32>
    tpu.vector_store %arg6[%c0_10, %c0_11], %12 {strides = array<i32>} : memref<16x1xf32, #tpu.memory_space<vmem>>, vector<16x1xf32>,
    return
  }
  func.func @transform_0(%arg0: i32) -> (i32, i32) {
    %c0_i32 = arith.constant 0 : i32
    %c0_i32_0 = arith.constant 0 : i32
    return %arg0, %c0_i32 : i32, i32
  }
  func.func @transform_1(%arg0: i32) -> (i32, i32) {
    %c0_i32 = arith.constant 0 : i32
    %c0_i32_0 = arith.constant 0 : i32
    %c0_i32_1 = arith.constant 0 : i32
    return %c0_i32, %c0_i32_0 : i32, i32
  }
  func.func @transform_2(%arg0: i32) -> (i32, i32) {
    %c0_i32 = arith.constant 0 : i32
    %c0_i32_0 = arith.constant 0 : i32
    %c0_i32_1 = arith.constant 0 : i32
    return %c0_i32, %c0_i32_0 : i32, i32
  }
  func.func @transform_3(%arg0: i32) -> (i32, i32) {
    %c0_i32 = arith.constant 0 : i32
    %c0_i32_0 = arith.constant 0 : i32
    %c0_i32_1 = arith.constant 0 : i32
    return %c0_i32, %c0_i32_0 : i32, i32
  }
  func.func @transform_4(%arg0: i32) -> (i32, i32) {
    %c0_i32 = arith.constant 0 : i32
    %c0_i32_0 = arith.constant 0 : i32
    return %arg0, %c0_i32 : i32, i32
  }
  func.func @transform_5(%arg0: i32) -> (i32, i32) {
    %c0_i32 = arith.constant 0 : i32
    %c0_i32_0 = arith.constant 0 : i32
    return %arg0, %c0_i32 : i32, i32
  }
}

</mosaic_0001>

<llo_original>
// kernel: tpu_custom_call.1
$region0: #{tpu_custom_call.1}
  #allocation0 [shape = 'u32[]', space=smem, size = 0x4, offset = 0x4, fixed_abs, tag = 'smem constant byte address 0x4 - core index']
  #allocation1 [shape = 'u32[144,128]{1,0:T(1,128)}', space=vmem, size = 0x12000, scoped, tag = 'internal scratch']
  %s0 = inlined_call_operand.hbm [shape: f32[16,32], index: 0, kind: input, shape index: {}]
  %s1 = inlined_call_operand.hbm [shape: f32[32,128], index: 1, kind: input, shape index: {}]
  %s2 = inlined_call_operand.vmem [shape: f32[1,128], index: 2, kind: input, shape index: {}]
  %s3 = inlined_call_operand.vmem [shape: f32[1,128], index: 3, kind: input, shape index: {}]
  %s4 = inlined_call_operand.hbm [shape: f32[16,128], index: 4, kind: output, shape index: {0}]
  %s5 = inlined_call_operand.vmem [shape: f32[16,1], index: 5, kind: output, shape index: {1}]
  %6 = xla_tuple %s4, %s5
  %s7 = sld [smem:[#allocation0]]
  $region42: #{tpu_custom_call.1} parent=0
    _
  %s9 = ssub.s32 1, %s7
  %s10 = scalar_select 0, %s9, %s7
  $region1: #{tpu_custom_call.1} parent=0
    #allocation2 [shape = 'u8[8192]{0}', space=vmem, size = 0x2000, scoped, tag = 'input window, operand 0, single buffered']
    #allocation3 [shape = 's32[1]{0}', space=sflag, size = 0x4, scoped, tag = 'scoped memory for tpu_custom_call.1']
    #allocation4 [shape = 's32[1]{0}', space=sflag, size = 0x4, scoped, tag = 'scoped memory for tpu_custom_call.1']
    #allocation5 [shape = 'u8[16384]{0}', space=vmem, size = 0x4000, scoped, tag = 'input window, operand 1, single buffered']
    #allocation6 [shape = 's32[1]{0}', space=sflag, size = 0x4, scoped, tag = 'scoped memory for tpu_custom_call.1']
    #allocation7 [shape = 'u8[8192]{0}', space=vmem, size = 0x2000, scoped, tag = 'output window, operand 0, single buffered']
    %11 = vsyncpa [#allocation3], 0
    %12 = vsyncpa [#allocation6], 0
    %13 = vsyncpa [#allocation4], 0
    // Predicated region
    $region2: #{tpu_custom_call.1} parent=1 // pred_check
      _
    $region3: #{tpu_custom_call.1} parent=1 // pred_check_branch
      %15 = sbr.rel (0) target = $region5
    $region4: #{tpu_custom_call.1} parent=1 // pred_region
      %s17 = ssub.s32 256, 256
      %18 = vsyncadd [#allocation3], %s17
      %s19 = sshll.u32 [#allocation2], 4
      %s20 = int_to_ptr.vmem [resolvable:$true] %s19
      %25 = dma.hbm_to_vmem [thread:$0]  %s0, 256, %s20, [#allocation3], 128, 128, 8
    $region5: #{tpu_custom_call.1} parent=1 // pred_fallthru
      _
    // Predicated region
    $region6: #{tpu_custom_call.1} parent=1 // pred_check
      _
    $region7: #{tpu_custom_call.1} parent=1 // pred_check_branch
      %27 = sbr.rel (0) target = $region9
    $region8: #{tpu_custom_call.1} parent=1 // pred_region
      %s29 = ssub.s32 512, 512
      %30 = vsyncadd [#allocation6], %s29
      %s31 = sshll.u32 [#allocation5], 4
      %s32 = int_to_ptr.vmem [resolvable:$true] %s31
      %37 = dma.hbm_to_vmem [thread:$0]  %s1, 512, %s32, [#allocation6], 128, 128, 8
    $region9: #{tpu_custom_call.1} parent=1 // pred_fallthru
      _
    // Predicated region
    $region10: #{tpu_custom_call.1} parent=1 // pred_check
      _
    $region11: #{tpu_custom_call.1} parent=1 // pred_check_branch
      %39 = sbr.rel (0) target = $region13
    $region12: #{tpu_custom_call.1} parent=1 // pred_region
      _
    $region13: #{tpu_custom_call.1} parent=1 // pred_fallthru
      _
    // Predicated region
    $region14: #{tpu_custom_call.1} parent=1 // pred_check
      _
    $region15: #{tpu_custom_call.1} parent=1 // pred_check_branch
      %41 = sbr.rel (0) target = $region17
    $region16: #{tpu_custom_call.1} parent=1 // pred_region
      _
    $region17: #{tpu_custom_call.1} parent=1 // pred_fallthru
      _
    // Predicated region
    $region18: #{tpu_custom_call.1} parent=1 // pred_check
      _
    $region19: #{tpu_custom_call.1} parent=1 // pred_check_branch
      %43 = sbr.rel (0) target = $region21
    $region20: #{tpu_custom_call.1} parent=1 // pred_region
      %44 = dma.done [#allocation3], 256
    $region21: #{tpu_custom_call.1} parent=1 // pred_fallthru
      _
    // Predicated region
    $region22: #{tpu_custom_call.1} parent=1 // pred_check
      _
    $region23: #{tpu_custom_call.1} parent=1 // pred_check_branch
      %46 = sbr.rel (0) target = $region25
    $region24: #{tpu_custom_call.1} parent=1 // pred_region
      %47 = dma.done [#allocation6], 512
    $region25: #{tpu_custom_call.1} parent=1 // pred_fallthru
      _
    %v48 = vld [vmem:[#allocation2] sm:$0xff]
    %v49 = vld [vmem:[#allocation2 + $0x8] sm:$0xff]
    %v50 = vld [vmem:[#allocation5] sm:$0xff]
    %v51 = vld [vmem:[#allocation5 + $0x8] sm:$0xff]
    %v52 = vld [vmem:[#allocation5 + $0x10] sm:$0xff]
    %v53 = vld [vmem:[#allocation5 + $0x18] sm:$0xff]
    %v54 = vld [vmem:[%s2] sm:$0x1]
    %v56 = vlaneseq
    %v57 = vshrl.u32 %v56, 7
    %v58 = vsub.s32 0, %v57
    %v59 = vrot.slane %v54, %v58
    %vm61 = vcmask 261120
    %v63 = vsel %vm61, %v48, 0
    %v66 = vsel %vm61, %v49, 0
    %68 = vmatprep.subr.mxu0 0.0
    %69 = vmatpush1.msra.mxu0 %v50
    %70 = vmatprep.subr.mxu0 0.0
    %71 = vmatpush1.msra.mxu0 %v51
    %72 = vmatprep.subr.mxu0 0.0
    %73 = vmatpush1.msra.mxu0 %v52
    %74 = vmatprep.subr.mxu0 0.0
    %75 = vmatpush1.msra.mxu0 %v53
    %76 = vmatprep.subr.mxu0 0.0
    %77 = vmatpush1.msra.mxu0 0.0
    %78 = vmatprep.subr.mxu0 0.0
    %79 = vmatpush1.msra.mxu0 0.0
    %80 = vmatprep.subr.mxu0 0.0
    %81 = vmatpush1.msra.mxu0 0.0
    %82 = vmatprep.subr.mxu0 0.0
    %83 = vmatpush1.msra.mxu0 0.0
    %84 = vmatprep.subr.mxu0 0.0
    %85 = vmatpush1.msra.mxu0 0.0
    %86 = vmatprep.subr.mxu0 0.0
    %87 = vmatpush1.msra.mxu0 0.0
    %88 = vmatprep.subr.mxu0 0.0
    %89 = vmatpush1.msra.mxu0 0.0
    %90 = vmatprep.subr.mxu0 0.0
    %91 = vmatpush1.msra.mxu0 0.0
    %92 = vmatprep.subr.mxu0 0.0
    %93 = vmatpush1.msra.mxu0 0.0
    %94 = vmatprep.subr.mxu0 0.0
    %95 = vmatpush1.msra.mxu0 0.0
    %96 = vmatprep.subr.mxu0 0.0
    %97 = vmatpush1.msra.mxu0 0.0
    %98 = vmatprep.subr.mxu0 0.0
    %99 = vmatpush1.msra.mxu0 0.0
    %100 = vmatprep.subr.mxu0 0.0
    %101 = vmatpush1.msra.mxu0 0.0
    %102 = vmatprep.subr.mxu0 0.0
    %103 = vmatpush1.msra.mxu0 0.0
    %104 = vmatprep.subr.mxu0 0.0
    %105 = vmatpush1.msra.mxu0 0.0
    %106 = vmatprep.subr.mxu0 0.0
    %107 = vmatpush1.msra.mxu0 0.0
    %108 = vmatprep.subr.mxu0 0.0
    %109 = vmatpush1.msra.mxu0 0.0
    %110 = vmatprep.subr.mxu0 0.0
    %111 = vmatpush1.msra.mxu0 0.0
    %112 = vmatprep.subr.mxu0 0.0
    %113 = vmatpush1.msra.mxu0 0.0
    %114 = vmatprep.subr.mxu0 0.0
    %115 = vmatpush1.msra.mxu0 0.0
    %116 = vmatprep.subr.mxu0 0.0
    %117 = vmatpush1.msra.mxu0 0.0
    %118 = vmatprep.subr.mxu0 0.0
    %119 = vmatpush1.msra.mxu0 0.0
    %120 = vmatprep.subr.mxu0 0.0
    %121 = vmatpush1.msra.mxu0 0.0
    %122 = vmatprep.subr.mxu0 0.0
    %123 = vmatpush1.msra.mxu0 0.0
    %124 = vmatprep.subr.mxu0 0.0
    %125 = vmatpush1.msra.mxu0 0.0
    %126 = vmatprep.subr.mxu0 0.0
    %127 = vmatpush1.msra.mxu0 0.0
    %128 = vmatprep.subr.mxu0 0.0
    %129 = vmatpush1.msra.mxu0 0.0
    %130 = vmatprep.subr.mxu0 0.0
    %131 = vmatpush1.msra.mxu0 0.0
    %132 = vmatprep.mubr.f32.mxu0 0.0
    %133 = vmatmul.mubr.f32.gmra.mrb[0].mxu0 %v63
    %v134 = vpop.f32.mrb[0].mxu0
    %v135 = vadd.f32 %v59, %v134
    %v136 = vpop.f32.mrb[0].mxu0
    %137 = vmatprep.mubr.f32.mxu0 0.0
    %138 = vmatmul.mubr.f32.gmra.mrb[0].mxu0 %v66
    %v139 = vpop.f32.mrb[0].mxu0
    %v140 = vadd.f32 %v59, %v139
    %v141 = vpop.f32.mrb[0].mxu0
    %142 = vdwg.mxu0
    %143 = vst [vmem:[#allocation7] sm:$0xff] %v135
    %144 = vst [vmem:[#allocation7 + $0x8] sm:$0xff] %v140
    %v145 = vld [vmem:[%s3] sm:$0x1]
    %v147 = vlaneseq
    %v148 = vshrl.u32 %v147, 7
    %v149 = vsub.s32 0, %v148
    %v150 = vrot.slane %v145, %v149
    %v152 = vmul.f32 %v135, %v150
    %v153 = vmul.f32 %v140, %v150
    %154 = vadd.xlane.f32.xlu0 %v152
    %v155 = vpop.xlane.xlu0 %154
    %156 = vadd.xlane.f32.xlu0 %v153
    %v157 = vpop.xlane.xlu0 %156
    %v158 = vtanh.pop %v155
    %v159 = vtanh.pop %v157
    %vm160 = vcmask 7168
    %161 = vst.msk [vmem:[%s5] sm:$0xff] %vm160, %v158
    %162 = vst.msk [vmem:[%s5 + $0x8] sm:$0xff] %vm160, %v159
    // Predicated region
    $region26: #{tpu_custom_call.1} parent=1 // pred_check
      _
    $region27: #{tpu_custom_call.1} parent=1 // pred_check_branch
      %164 = sbr.rel (0) target = $region29
    $region28: #{tpu_custom_call.1} parent=1 // pred_region
      %s166 = ssub.s32 256, 256
      %167 = vsyncadd [#allocation4], %s166
      %s168 = sshll.u32 [#allocation7], 4
      %s169 = int_to_ptr.vmem [resolvable:$true] %s168
      %174 = dma.vmem_to_hbm [thread:$0]  %s169, 256, %s4, [#allocation4], 128, 128, 8
    $region29: #{tpu_custom_call.1} parent=1 // pred_fallthru
      _
    // Predicated region
    $region30: #{tpu_custom_call.1} parent=1 // pred_check
      _
    $region31: #{tpu_custom_call.1} parent=1 // pred_check_branch
      %176 = sbr.rel (0) target = $region33
    $region32: #{tpu_custom_call.1} parent=1 // pred_region
      _
    $region33: #{tpu_custom_call.1} parent=1 // pred_fallthru
      _
    // Predicated region
    $region34: #{tpu_custom_call.1} parent=1 // pred_check
      _
    $region35: #{tpu_custom_call.1} parent=1 // pred_check_branch
      %178 = sbr.rel (0) target = $region37
    $region36: #{tpu_custom_call.1} parent=1 // pred_region
      %179 = dma.done [#allocation4], 256
    $region37: #{tpu_custom_call.1} parent=1 // pred_fallthru
      _
    // Predicated region
    $region38: #{tpu_custom_call.1} parent=1 // pred_check
      _
    $region39: #{tpu_custom_call.1} parent=1 // pred_check_branch
      %181 = sbr.rel (0) target = $region41
    $region40: #{tpu_custom_call.1} parent=1 // pred_region
      _
    $region41: #{tpu_custom_call.1} parent=1 // pred_fallthru
      _
    %182 = vsyncpa [#allocation3], 1
    %183 = vsyncpa [#allocation6], 1
    %184 = vsyncpa [#allocation4], 1

</llo_original>
